<compile_context>
chip_gen: v5e
topology: v5e:2x2
jax: 0.10.0
libtpu: 0.0.40
codegen_flags: <defaults>
</compile_context>

<pallas_src>
import functools

import jax
import jax.numpy as jnp
from jax.experimental import pallas as pl
from jax.experimental.pallas import tpu as pltpu


# ----------------------------------------------------------------------------
# Fused Pallas kernel
# ----------------------------------------------------------------------------
def fused_bilinear_mlp_kernel(*refs, relu_before, relu_after):
    """Whole BilinearMLPPredictor forward for one batch tile.

    refs = [h12,                                  # (2, TB, Din) stacked h1/h2 (bf16)
            (w, b) * len(relu_before),            # before-merge MLP
            wf, wg,                               # bilinear merge (diag folded in wg)
            (w, b) * len(relu_after),             # after-merge MLP (1st layer has
                                                  #   selector + offsets pre-fused)
            out]
    """
    n_before = len(relu_before)
    n_after = len(relu_after)

    idx = 0
    h12_ref = refs[idx]
    idx += 1
    before = [(refs[idx + 2 * i], refs[idx + 2 * i + 1]) for i in range(n_before)]
    idx += 2 * n_before
    wf_ref, wg_ref = refs[idx], refs[idx + 1]
    idx += 2
    after = [(refs[idx + 2 * i], refs[idx + 2 * i + 1]) for i in range(n_after)]
    idx += 2 * n_after
    o_ref = refs[idx]

    def dense(x, w_ref, b_ref, relu):
        # bf16 MXU inputs, f32 accumulation; bias/relu in f32 on the VPU.
        y = jnp.dot(x.astype(w_ref.dtype), w_ref[...],
                    preferred_element_type=jnp.float32)
        y = y + b_ref[...]
        return jnp.maximum(y, 0.0) if relu else y

    # Shared before-merge MLP, run once on the stacked [h1; h2] batch.  The
    # (2, TB, Din) -> (2*TB, Din) reshape is a layout no-op for TB % 8 == 0.
    _two, tb, din = h12_ref.shape
    x = h12_ref[...].reshape(2 * tb, din)
    for (w_ref, b_ref), relu in zip(before, relu_before):
        x = dense(x, w_ref, b_ref, relu)

    h1, h2 = x[:tb], x[tb:]

    # Bilinear merge: two MXU matmuls + one VPU elementwise multiply.  The
    # diag scaling is already folded into wg; the sum over `a`, the offsets and
    # the first after-merge layer are one fused matmul below.
    t1 = jnp.dot(h1.astype(wf_ref.dtype), wf_ref[...],
                 preferred_element_type=jnp.float32)
    t2 = jnp.dot(h2.astype(wg_ref.dtype), wg_ref[...],
                 preferred_element_type=jnp.float32)
    x = t1 * t2

    # After-merge MLP (first layer's weight = tiled w0 == sel @ w0, bias
    # already includes offsets @ w0).
    for (w_ref, b_ref), relu in zip(after, relu_after):
        x = dense(x, w_ref, b_ref, relu)
    o_ref[...] = x.astype(o_ref.dtype)


def _round_up(x, m):
    return ((x + m - 1) // m) * m


def pallas_forward(h1_in, h2_in, prep, *, block_b=512):
    """Single fused pallas_call for the whole forward pass."""
    B, Din = h1_in.shape
    before, after = prep["before"], prep["after"]
    wf, wg = prep["wf"], prep["wg"]
    Dout = after[-1][0].shape[1]

    # Tile policy:
    #  * TB 8-aligned (sublane) so the in-kernel reshape / h1-h2 split are free.
    #  * Force >= 2 grid steps once TB can stay >= 128 (MXU M = 2*TB >= 256 on
    #    v6e/v7x) so v7x's second TensorCore gets half the batch.
    #  * Cap TB at block_b (default 512) so the (TB, D^2) f32 temporaries fit
    #    v7x's 64 MiB VMEM; raise block_b on v5e/v6e if profiling warrants.
    TB = min(block_b, _round_up(B, 8))
    if B >= 256:
        TB = min(block_b, max(128, _round_up(pl.cdiv(B, 2), 8)))
    grid_b = pl.cdiv(B, TB)
    Bp = grid_b * TB

    # Stack h1/h2 host-side (shared before-MLP runs once on both), cast to bf16
    # (the first matmul would cast anyway; halves the only B-scaling HBM read),
    # and pad the batch to a whole number of tiles.
    h12 = jnp.stack([h1_in, h2_in], axis=0).astype(wf.dtype)
    if Bp != B:
        h12 = jnp.pad(h12, ((0, 0), (0, Bp - B), (0, 0)))

    const = lambda i: (0, 0)   # weights / merge operands: same block every step
    operands = [h12]
    in_specs = [pl.BlockSpec((2, TB, Din), lambda i: (0, i, 0))]
    for w, b, _ in before:
        operands += [w, b]
        in_specs += [pl.BlockSpec(w.shape, const), pl.BlockSpec(b.shape, const)]
    operands += [wf, wg]
    in_specs += [pl.BlockSpec(wf.shape, const), pl.BlockSpec(wg.shape, const)]
    for w, b, _ in after:
        operands += [w, b]
        in_specs += [pl.BlockSpec(w.shape, const), pl.BlockSpec(b.shape, const)]
    # NOTE: pipeline_mode=pl.Buffered(1) on the constant-mapped operands would
    # trim ~200 KiB of double-buffered VMEM; skipped as a low-value knob.

    kernel = functools.partial(
        fused_bilinear_mlp_kernel,
        relu_before=tuple(r for (_, _, r) in before),
        relu_after=tuple(r for (_, _, r) in after),
    )

    out = pl.pallas_call(
        kernel,
        out_shape=jax.ShapeDtypeStruct((Bp, Dout), jnp.float32),
        grid=(grid_b,),
        in_specs=in_specs,
        out_specs=pl.BlockSpec((TB, Dout), lambda i: (i, 0)),
        compiler_params=pltpu.CompilerParams(
            dimension_semantics=("parallel",)),   # batch tiles independent
    )(*operands)
    return out[:B]


# ----------------------------------------------------------------------------
# Parameters: init (f32 masters) + one-time hoisted prep (constants, fusions)
# ----------------------------------------------------------------------------
def init_params(key, layer_dims, merge_n, allow_neg_eigval):
    """Deterministic synthetic params matching BilinearMLPPredictor.__init__."""
    merge_dim = layer_dims[-merge_n - 1]
    n_layers = len(layer_dims) - 1

    def make_mlp(key, idx_range):
        layers = []
        for i in idx_range:
            key, k1, k2 = jax.random.split(key, 3)
            w = 0.1 * jax.random.normal(k1, (layer_dims[i], layer_dims[i + 1]),
                                        dtype=jnp.float32)
            b = 0.01 * jax.random.normal(k2, (1, layer_dims[i + 1]),
                                         dtype=jnp.float32)
            apply_relu = (i != len(layer_dims) - 2)   # add_layer() rule
            layers.append((w, b, apply_relu))
        return key, layers

    key, before_layers = make_mlp(key, range(n_layers - merge_n))
    key, after_layers = make_mlp(key, range(n_layers - merge_n, n_layers))

    key, k1, k2, k3 = jax.random.split(key, 4)
    D = merge_dim
    bilinear_weights = (0.01 * jax.random.normal(k1, (D, D, D), dtype=jnp.float32)
                        + jnp.broadcast_to(jnp.eye(D, dtype=jnp.float32), (D, D, D)))
    bilinear_offsets = 0.01 * jax.random.normal(k2, (D,), dtype=jnp.float32)
    bilinear_diag = (0.01 * jax.random.normal(k3, (D, D), dtype=jnp.float32) + 1.0
                     if allow_neg_eigval else None)
    return before_layers, after_layers, bilinear_weights, bilinear_offsets, bilinear_diag


def prepare_params(before_layers, after_layers, W3, offsets, diag,
                   mxu_dtype=jnp.bfloat16):
    """One-time constant prep (hoisted out of the per-call path).

    * wf[k, a*D+c] = W[a,c,k]
    * wg[m, a*D+c] = W[c,a,m] * diag[a,c]          (diag folded in)
    * first after-merge layer pre-fused with the `sum over a` selector and the
      bilinear offsets: w0' = sel @ w0 = tile(w0, (D,1)),  b0' = b0 + off @ w0.
    """
    D = W3.shape[0]
    wf = jnp.transpose(W3, (2, 0, 1)).reshape(D, D * D)
    wg = jnp.transpose(W3, (2, 1, 0)).reshape(D, D * D)
    if diag is not None:
        wg = wg * diag.reshape(1, D * D)
    off = offsets.reshape(1, D).astype(jnp.float32)

    if after_layers:
        w0, b0, r0 = after_layers[0]
        fused_w0 = jnp.tile(w0, (D, 1))               # == sel @ w0 (sel is 0/1)
        fused_b0 = (b0 + off @ w0).astype(jnp.float32)
        after_fused = [(fused_w0.astype(mxu_dtype), fused_b0, r0)]
        after_fused += [(w.astype(mxu_dtype), b, r) for (w, b, r) in after_layers[1:]]
    else:
        # No after-merge MLP (cannot happen given the module's assert, but keep
        # the fallback): plain selector matmul + offsets.
        sel = jnp.tile(jnp.eye(D, dtype=jnp.float32), (D, 1))
        after_fused = [(sel.astype(mxu_dtype), off, False)]

    return {
        # MXU-feeding weights stored in bf16; biases stay f32 (VPU math).
        "before": [(w.astype(mxu_dtype), b, r) for (w, b, r) in before_layers],
        "wf": wf.astype(mxu_dtype),
        "wg": wg.astype(mxu_dtype),
        "after": after_fused,
    }


# ----------------------------------------------------------------------------
# References
# ----------------------------------------------------------------------------
def reference_forward_f32(h1_in, h2_in, before_layers, after_layers,
                          W3, offsets, diag, allow_neg_eigval):
    """Literal f32 transcription of the PyTorch forward (semantic reference)."""
    def mlp(x, layers):
        for (w, b, relu) in layers:
            x = x @ w + b[0]
            if relu:
                x = jnp.maximum(x, 0.0)
        return x

    h1 = mlp(h1_in, before_layers)
    h2 = mlp(h2_in, before_layers)
    # torch: bilinear_weights.matmul(h.T).T   (3-D .T reverses all dims)
    h1b = jnp.transpose(jnp.einsum('ijk,bk->ijb', W3, h1), (2, 1, 0))
    h2b = jnp.transpose(jnp.einsum('ijk,bk->ijb', W3, h2), (2, 1, 0))
    if allow_neg_eigval:
        h2b = h2b * diag[None, :, :]
    h1b = jnp.transpose(h1b, (0, 2, 1))      # permute(0, 2, 1)
    s = (h1b * h2b).sum(axis=1) + offsets
    return mlp(s, after_layers)


def reference_forward_matched(h1_in, h2_in, prep):
    """Same computation with the same folded operands / bf16-MXU casts as the kernel."""
    def dense(x, w, b, relu):
        y = jnp.dot(x.astype(w.dtype), w, preferred_element_type=jnp.float32) + b
        return jnp.maximum(y, 0.0) if relu else y

    x = jnp.concatenate([h1_in, h2_in], axis=0).astype(prep["wf"].dtype)
    for (w, b, relu) in prep["before"]:
        x = dense(x, w, b, relu)
    B = h1_in.shape[0]
    h1, h2 = x[:B], x[B:]
    t1 = jnp.dot(h1.astype(prep["wf"].dtype), prep["wf"],
                 preferred_element_type=jnp.float32)
    t2 = jnp.dot(h2.astype(prep["wg"].dtype), prep["wg"],
                 preferred_element_type=jnp.float32)
    x = t1 * t2
    for (w, b, relu) in prep["after"]:
        x = dense(x, w, b, relu)
    return x


# ----------------------------------------------------------------------------
if __name__ == "__main__":
    key = jax.random.PRNGKey(0)

    # Synthetic config consistent with the module: predictor_layers,
    # merge_n_layers_before_the_end, allow_neg_eigval.
    layer_dims = [32, 64, 32, 16]     # in_dim -> ... -> merge_dim(=32) -> out
    merge_n = 1
    allow_neg_eigval = True
    batch = 8
    num_drugs = 10

    (before_layers, after_layers,
     bilinear_weights, bilinear_offsets, bilinear_diag) = init_params(
        key, layer_dims, merge_n, allow_neg_eigval)

    # One-time hoisted constant prep (wf/wg with diag folded, sel/off fused
    # into the first after layer, bf16 casts).
    prep = prepare_params(before_layers, after_layers,
                          bilinear_weights, bilinear_offsets, bilinear_diag)

    # Synthetic `data` / `drug_drug_batch`; get_batch() gather stays host-side JAX.
    key, kx, kp, kc = jax.random.split(key, 4)
    x_drugs = jax.random.normal(kx, (num_drugs, layer_dims[0]), dtype=jnp.float32)
    drug_pairs = jax.random.randint(kp, (batch, 2), 0, num_drugs)
    cell_lines = jax.random.randint(kc, (batch,), 0, 4)   # passed along, unused

    h_drug_1 = x_drugs[drug_pairs[:, 0]]
    h_drug_2 = x_drugs[drug_pairs[:, 1]]
    del cell_lines  # LinearModule/ReLUModule just forward it untouched

    out = pallas_forward(h_drug_1, h_drug_2, prep)
    out = jax.block_until_ready(out)

    ref_matched = reference_forward_matched(h_drug_1, h_drug_2, prep)
    ref_f32 = reference_forward_f32(h_drug_1, h_drug_2, before_layers,
                                    after_layers, bilinear_weights,
                                    bilinear_offsets, bilinear_diag,
                                    allow_neg_eigval)

    assert out.shape == (batch, layer_dims[-1])

    # Tight check vs a reference with identical folded operands / bf16 casts.
    err_matched = float(jnp.max(jnp.abs(out - ref_matched)))
    assert err_matched < 5e-3, f"matched-precision max abs err = {err_matched}"

    # Loose, scale-relative check vs the pure-f32 PyTorch semantics reference
    # (bf16 MXU inputs introduce ~1e-2 relative error, as expected).
    scale = max(1.0, float(jnp.max(jnp.abs(ref_f32))))
    err_f32 = float(jnp.max(jnp.abs(out - ref_f32)))
    assert err_f32 / scale < 0.1, f"f32-reference scaled err = {err_f32 / scale}"

    print("KERNEL_OK")
</pallas_src>

<mosaic_0001>
module attributes {stable_mosaic.version = 11 : i64} {
  func.func @fused_bilinear_mlp_kernel(%arg0: i32, %arg1: memref<2x8x32xbf16, #tpu.memory_space<vmem>>, %arg2: memref<32x64xbf16, #tpu.memory_space<vmem>>, %arg3: memref<1x64xf32, #tpu.memory_space<vmem>>, %arg4: memref<64x32xbf16, #tpu.memory_space<vmem>>, %arg5: memref<1x32xf32, #tpu.memory_space<vmem>>, %arg6: memref<32x1024xbf16, #tpu.memory_space<vmem>>, %arg7: memref<32x1024xbf16, #tpu.memory_space<vmem>>, %arg8: memref<1024x16xbf16, #tpu.memory_space<vmem>>, %arg9: memref<1x16xf32, #tpu.memory_space<vmem>>, %arg10: memref<8x16xf32, #tpu.memory_space<vmem>>) attributes {dimension_semantics = [#tpu.dimension_semantics<parallel>], iteration_bounds = array<i64: 1>, scalar_prefetch = 0 : i64, scratch_operands = 0 : i64, tpu.core_type = #tpu.core_type<tc>, window_params = [{transform_indices = @transform_0, window_bounds = array<i64: 2, 8, 32>}, {pipeline_mode = #tpu.pipeline_mode<synchronous>, transform_indices = @transform_1, window_bounds = array<i64: 32, 64>}, {pipeline_mode = #tpu.pipeline_mode<synchronous>, transform_indices = @transform_2, window_bounds = array<i64: 1, 64>}, {pipeline_mode = #tpu.pipeline_mode<synchronous>, transform_indices = @transform_3, window_bounds = array<i64: 64, 32>}, {pipeline_mode = #tpu.pipeline_mode<synchronous>, transform_indices = @transform_4, window_bounds = array<i64: 1, 32>}, {pipeline_mode = #tpu.pipeline_mode<synchronous>, transform_indices = @transform_5, window_bounds = array<i64: 32, 1024>}, {pipeline_mode = #tpu.pipeline_mode<synchronous>, transform_indices = @transform_6, window_bounds = array<i64: 32, 1024>}, {pipeline_mode = #tpu.pipeline_mode<synchronous>, transform_indices = @transform_7, window_bounds = array<i64: 1024, 16>}, {pipeline_mode = #tpu.pipeline_mode<synchronous>, transform_indices = @transform_8, window_bounds = array<i64: 1, 16>}, {transform_indices = @transform_9, window_bounds = array<i64: 8, 16>}]} {
    %c0 = arith.constant 0 : index
    %c0_0 = arith.constant 0 : index
    %c0_1 = arith.constant 0 : index
    %0 = vector.load %arg1[%c0, %c0_0, %c0_1] : memref<2x8x32xbf16, #tpu.memory_space<vmem>>, vector<2x8x32xbf16>
    %1 = vector.shape_cast %0 : vector<2x8x32xbf16> to vector<16x32xbf16>
    %c0_2 = arith.constant 0 : index
    %c0_3 = arith.constant 0 : index
    %2 = vector.load %arg2[%c0_2, %c0_3] : memref<32x64xbf16, #tpu.memory_space<vmem>>, vector<32x64xbf16>
    %cst = arith.constant dense<0.000000e+00> : vector<16x64xf32>
    %3 = tpu.matmul %1, %2, %cst {dimension_numbers = #tpu.dot_dimension_numbers<[1], [0], [0], [1], [0, 0, 1, 1], [], []>} : vector<16x32xbf16>, vector<32x64xbf16>, vector<16x64xf32> -> vector<16x64xf32>
    %c0_4 = arith.constant 0 : index
    %c0_5 = arith.constant 0 : index
    %4 = vector.load %arg3[%c0_4, %c0_5] : memref<1x64xf32, #tpu.memory_space<vmem>>, vector<1x64xf32>
    %5 = vector.broadcast %4 : vector<1x64xf32> to vector<16x64xf32>
    %6 = arith.addf %3, %5 : vector<16x64xf32>
    %cst_6 = arith.constant 0.000000e+00 : f32
    %7 = vector.broadcast %cst_6 : f32 to vector<16x64xf32>
    %8 = arith.maximumf %6, %7 : vector<16x64xf32>
    %9 = arith.truncf %8 : vector<16x64xf32> to vector<16x64xbf16>
    %c0_7 = arith.constant 0 : index
    %c0_8 = arith.constant 0 : index
    %10 = vector.load %arg4[%c0_7, %c0_8] : memref<64x32xbf16, #tpu.memory_space<vmem>>, vector<64x32xbf16>
    %cst_9 = arith.constant dense<0.000000e+00> : vector<16x32xf32>
    %11 = tpu.matmul %9, %10, %cst_9 {dimension_numbers = #tpu.dot_dimension_numbers<[1], [0], [0], [1], [0, 0, 1, 1], [], []>} : vector<16x64xbf16>, vector<64x32xbf16>, vector<16x32xf32> -> vector<16x32xf32>
    %c0_10 = arith.constant 0 : index
    %c0_11 = arith.constant 0 : index
    %12 = vector.load %arg5[%c0_10, %c0_11] : memref<1x32xf32, #tpu.memory_space<vmem>>, vector<1x32xf32>
    %13 = vector.broadcast %12 : vector<1x32xf32> to vector<16x32xf32>
    %14 = arith.addf %11, %13 : vector<16x32xf32>
    %cst_12 = arith.constant 0.000000e+00 : f32
    %15 = vector.broadcast %cst_12 : f32 to vector<16x32xf32>
    %16 = arith.maximumf %14, %15 : vector<16x32xf32>
    %17 = vector.extract_strided_slice %16 {offsets = [0, 0], sizes = [8, 32], strides = [1, 1]} : vector<16x32xf32> to vector<8x32xf32>
    %18 = vector.extract_strided_slice %16 {offsets = [8, 0], sizes = [8, 32], strides = [1, 1]} : vector<16x32xf32> to vector<8x32xf32>
    %19 = arith.truncf %17 : vector<8x32xf32> to vector<8x32xbf16>
    %c0_13 = arith.constant 0 : index
    %c0_14 = arith.constant 0 : index
    %20 = vector.load %arg6[%c0_13, %c0_14] : memref<32x1024xbf16, #tpu.memory_space<vmem>>, vector<32x1024xbf16>
    %cst_15 = arith.constant dense<0.000000e+00> : vector<8x1024xf32>
    %21 = tpu.matmul %19, %20, %cst_15 {dimension_numbers = #tpu.dot_dimension_numbers<[1], [0], [0], [1], [0, 0, 1, 1], [], []>} : vector<8x32xbf16>, vector<32x1024xbf16>, vector<8x1024xf32> -> vector<8x1024xf32>
    %22 = arith.truncf %18 : vector<8x32xf32> to vector<8x32xbf16>
    %c0_16 = arith.constant 0 : index
    %c0_17 = arith.constant 0 : index
    %23 = vector.load %arg7[%c0_16, %c0_17] : memref<32x1024xbf16, #tpu.memory_space<vmem>>, vector<32x1024xbf16>
    %cst_18 = arith.constant dense<0.000000e+00> : vector<8x1024xf32>
    %24 = tpu.matmul %22, %23, %cst_18 {dimension_numbers = #tpu.dot_dimension_numbers<[1], [0], [0], [1], [0, 0, 1, 1], [], []>} : vector<8x32xbf16>, vector<32x1024xbf16>, vector<8x1024xf32> -> vector<8x1024xf32>
    %25 = arith.mulf %21, %24 : vector<8x1024xf32>
    %26 = arith.truncf %25 : vector<8x1024xf32> to vector<8x1024xbf16>
    %c0_19 = arith.constant 0 : index
    %c0_20 = arith.constant 0 : index
    %27 = vector.load %arg8[%c0_19, %c0_20] : memref<1024x16xbf16, #tpu.memory_space<vmem>>, vector<1024x16xbf16>
    %cst_21 = arith.constant dense<0.000000e+00> : vector<8x16xf32>
    %28 = tpu.matmul %26, %27, %cst_21 {dimension_numbers = #tpu.dot_dimension_numbers<[1], [0], [0], [1], [0, 0, 1, 1], [], []>} : vector<8x1024xbf16>, vector<1024x16xbf16>, vector<8x16xf32> -> vector<8x16xf32>
    %c0_22 = arith.constant 0 : index
    %c0_23 = arith.constant 0 : index
    %29 = vector.load %arg9[%c0_22, %c0_23] : memref<1x16xf32, #tpu.memory_space<vmem>>, vector<1x16xf32>
    %30 = vector.broadcast %29 : vector<1x16xf32> to vector<8x16xf32>
    %31 = arith.addf %28, %30 : vector<8x16xf32>
    %c0_24 = arith.constant 0 : index
    %c0_25 = arith.constant 0 : index
    %32 = vector.load %arg10[%c0_24, %c0_25] : memref<8x16xf32, #tpu.memory_space<vmem>>, vector<8x16xf32>
    tpu.vector_store %arg10[%c0_24, %c0_25], %31 {strides = array<i32>} : memref<8x16xf32, #tpu.memory_space<vmem>>, vector<8x16xf32>,
    return
  }
  func.func @transform_0(%arg0: i32) -> (i32, i32, i32) {
    %c0_i32 = arith.constant 0 : i32
    %c0_i32_0 = arith.constant 0 : i32
    %c0_i32_1 = arith.constant 0 : i32
    return %c0_i32, %arg0, %c0_i32_0 : i32, i32, i32
  }
  func.func @transform_1(%arg0: i32) -> (i32, i32) {
    %c0_i32 = arith.constant 0 : i32
    %c0_i32_0 = arith.constant 0 : i32
    %c0_i32_1 = arith.constant 0 : i32
    return %c0_i32, %c0_i32_0 : i32, i32
  }
  func.func @transform_2(%arg0: i32) -> (i32, i32) {
    %c0_i32 = arith.constant 0 : i32
    %c0_i32_0 = arith.constant 0 : i32
    %c0_i32_1 = arith.constant 0 : i32
    return %c0_i32, %c0_i32_0 : i32, i32
  }
  func.func @transform_3(%arg0: i32) -> (i32, i32) {
    %c0_i32 = arith.constant 0 : i32
    %c0_i32_0 = arith.constant 0 : i32
    %c0_i32_1 = arith.constant 0 : i32
    return %c0_i32, %c0_i32_0 : i32, i32
  }
  func.func @transform_4(%arg0: i32) -> (i32, i32) {
    %c0_i32 = arith.constant 0 : i32
    %c0_i32_0 = arith.constant 0 : i32
    %c0_i32_1 = arith.constant 0 : i32
    return %c0_i32, %c0_i32_0 : i32, i32
  }
  func.func @transform_5(%arg0: i32) -> (i32, i32) {
    %c0_i32 = arith.constant 0 : i32
    %c0_i32_0 = arith.constant 0 : i32
    %c0_i32_1 = arith.constant 0 : i32
    return %c0_i32, %c0_i32_0 : i32, i32
  }
  func.func @transform_6(%arg0: i32) -> (i32, i32) {
    %c0_i32 = arith.constant 0 : i32
    %c0_i32_0 = arith.constant 0 : i32
    %c0_i32_1 = arith.constant 0 : i32
    return %c0_i32, %c0_i32_0 : i32, i32
  }
  func.func @transform_7(%arg0: i32) -> (i32, i32) {
    %c0_i32 = arith.constant 0 : i32
    %c0_i32_0 = arith.constant 0 : i32
    %c0_i32_1 = arith.constant 0 : i32
    return %c0_i32, %c0_i32_0 : i32, i32
  }
  func.func @transform_8(%arg0: i32) -> (i32, i32) {
    %c0_i32 = arith.constant 0 : i32
    %c0_i32_0 = arith.constant 0 : i32
    %c0_i32_1 = arith.constant 0 : i32
    return %c0_i32, %c0_i32_0 : i32, i32
  }
  func.func @transform_9(%arg0: i32) -> (i32, i32) {
    %c0_i32 = arith.constant 0 : i32
    %c0_i32_0 = arith.constant 0 : i32
    return %arg0, %c0_i32 : i32, i32
  }
}

</mosaic_0001>

<llo_original>
// kernel: tpu_custom_call.1
$region0: #{tpu_custom_call.1}
  #allocation0 [shape = 'u32[]', space=smem, size = 0x4, offset = 0x4, fixed_abs, tag = 'smem constant byte address 0x4 - core index']
  #allocation1 [shape = 'u32[72,128]{1,0:T(1,128)}', space=vmem, size = 0x9000, scoped, tag = 'internal scratch']
  %s0 = inlined_call_operand.vmem [shape: bf16[2,8,32], index: 0, kind: input, shape index: {}]
  %s1 = inlined_call_operand.vmem [shape: bf16[32,64], index: 1, kind: input, shape index: {}]
  %s2 = inlined_call_operand.vmem [shape: f32[1,64], index: 2, kind: input, shape index: {}]
  %s3 = inlined_call_operand.vmem [shape: bf16[64,32], index: 3, kind: input, shape index: {}]
  %s4 = inlined_call_operand.vmem [shape: f32[1,32], index: 4, kind: input, shape index: {}]
  %s5 = inlined_call_operand.vmem [shape: bf16[32,1024], index: 5, kind: input, shape index: {}]
  %s6 = inlined_call_operand.vmem [shape: bf16[32,1024], index: 6, kind: input, shape index: {}]
  %s7 = inlined_call_operand.vmem [shape: bf16[1024,16], index: 7, kind: input, shape index: {}]
  %s8 = inlined_call_operand.vmem [shape: f32[1,16], index: 8, kind: input, shape index: {}]
  %s9 = inlined_call_operand.hbm [shape: f32[8,16], index: 9, kind: output, shape index: {}]
  %s10 = sld [smem:[#allocation0]]
  $region46: #{tpu_custom_call.1} parent=0
    _
  %s12 = ssub.s32 1, %s10
  %s13 = scalar_select 0, %s12, %s10
  $region1: #{tpu_custom_call.1} parent=0
    #allocation2 [shape = 'u8[4096]{0}', space=vmem, size = 0x1000, scoped, tag = 'output window, operand 0, single buffered']
    #allocation3 [shape = 's32[1]{0}', space=sflag, size = 0x4, scoped, tag = 'scoped memory for tpu_custom_call.1']
    %14 = vsyncpa [#allocation3], 0
    // Predicated region
    $region2: #{tpu_custom_call.1} parent=1 // pred_check
      _
    $region3: #{tpu_custom_call.1} parent=1 // pred_check_branch
      %16 = sbr.rel (0) target = $region5
    $region4: #{tpu_custom_call.1} parent=1 // pred_region
      _
    $region5: #{tpu_custom_call.1} parent=1 // pred_fallthru
      _
    // Predicated region
    $region6: #{tpu_custom_call.1} parent=1 // pred_check
      _
    $region7: #{tpu_custom_call.1} parent=1 // pred_check_branch
      %18 = sbr.rel (0) target = $region9
    $region8: #{tpu_custom_call.1} parent=1 // pred_region
      _
    $region9: #{tpu_custom_call.1} parent=1 // pred_fallthru
      _
    // Predicated region
    $region10: #{tpu_custom_call.1} parent=1 // pred_check
      _
    $region11: #{tpu_custom_call.1} parent=1 // pred_check_branch
      %20 = sbr.rel (0) target = $region13
    $region12: #{tpu_custom_call.1} parent=1 // pred_region
      _
    $region13: #{tpu_custom_call.1} parent=1 // pred_fallthru
      _
    // Predicated region
    $region14: #{tpu_custom_call.1} parent=1 // pred_check
      _
    $region15: #{tpu_custom_call.1} parent=1 // pred_check_branch
      %22 = sbr.rel (0) target = $region17
    $region16: #{tpu_custom_call.1} parent=1 // pred_region
      _
    $region17: #{tpu_custom_call.1} parent=1 // pred_fallthru
      _
    // Predicated region
    $region18: #{tpu_custom_call.1} parent=1 // pred_check
      _
    $region19: #{tpu_custom_call.1} parent=1 // pred_check_branch
      %24 = sbr.rel (0) target = $region21
    $region20: #{tpu_custom_call.1} parent=1 // pred_region
      _
    $region21: #{tpu_custom_call.1} parent=1 // pred_fallthru
      _
    // Predicated region
    $region22: #{tpu_custom_call.1} parent=1 // pred_check
      _
    $region23: #{tpu_custom_call.1} parent=1 // pred_check_branch
      %26 = sbr.rel (0) target = $region25
    $region24: #{tpu_custom_call.1} parent=1 // pred_region
      _
    $region25: #{tpu_custom_call.1} parent=1 // pred_fallthru
      _
    // Predicated region
    $region26: #{tpu_custom_call.1} parent=1 // pred_check
      _
    $region27: #{tpu_custom_call.1} parent=1 // pred_check_branch
      %28 = sbr.rel (0) target = $region29
    $region28: #{tpu_custom_call.1} parent=1 // pred_region
      _
    $region29: #{tpu_custom_call.1} parent=1 // pred_fallthru
      _
    // Predicated region
    $region30: #{tpu_custom_call.1} parent=1 // pred_check
      _
    $region31: #{tpu_custom_call.1} parent=1 // pred_check_branch
      %30 = sbr.rel (0) target = $region33
    $region32: #{tpu_custom_call.1} parent=1 // pred_region
      _
    $region33: #{tpu_custom_call.1} parent=1 // pred_fallthru
      _
    // Predicated region
    $region34: #{tpu_custom_call.1} parent=1 // pred_check
      _
    $region35: #{tpu_custom_call.1} parent=1 // pred_check_branch
      %32 = sbr.rel (0) target = $region37
    $region36: #{tpu_custom_call.1} parent=1 // pred_region
      _
    $region37: #{tpu_custom_call.1} parent=1 // pred_fallthru
      _
    %v34 = vld [vmem:[%s0] sm:$0xf]
    %v35 = vld [vmem:[%s0 + $0x4] sm:$0xf]
    %v36 = vld [vmem:[%s1] sm:$0xf]
    %v37 = vld [vmem:[%s1 + $0x4] sm:$0xf]
    %v38 = vld [vmem:[%s1 + $0x8] sm:$0xf]
    %v39 = vld [vmem:[%s1 + $0xc] sm:$0xf]
    %v40 = vld [vmem:[%s2] sm:$0x1]
    %v42 = vperm.slane %v40, 0
    %v46 = vunpack.c.l.b16 %v34
    %v47 = vunpack.c.l.b16 %v35
    %v48 = vpack.c.b16 %v47, %v46
    %v53 = vunpack.c.l.b16 %v36
    %v54 = vunpack.c.l.b16 %v37
    %v55 = vunpack.c.l.b16 %v38
    %v56 = vunpack.c.l.b16 %v39
    %v57 = vpack.c.b16 %v54, %v53
    %v58 = vpack.c.b16 %v56, %v55
    %vm61 = vcmask 261120
    %v63 = vsel %vm61, %v48, 0
    %65 = vmatpush.bf16.msra.mxu0 0
    %66 = vmatpush.bf16.msra.mxu0 0
    %67 = vmatpush.bf16.msra.mxu0 0
    %68 = vmatpush.bf16.msra.mxu0 0
    %69 = vmatpush.bf16.msra.mxu0 0
    %70 = vmatpush.bf16.msra.mxu0 0
    %71 = vmatpush.bf16.msra.mxu0 %v58
    %72 = vmatpush.bf16.msra.mxu0 %v57
    %73 = vmatmul.bf16.gmra.mxu0 %v63
    %v74 = vpop.f32.mrf.mxu0
    %v75 = vadd.f32 %v42, %v74
    %v76 = vpop.f32.mrf.mxu0
    %v77 = vadd.f32 %v42, %v76
    %78 = vdwg.mxu0
    %v79 = vmax.f32 %v75, 0.0
    %v80 = vmax.f32 %v77, 0.0
    %v81 = vpack.c.bf16 %v80, %v79
    %v82 = vld [vmem:[%s3] sm:$0xf]
    %v83 = vld [vmem:[%s3 + $0x4] sm:$0xf]
    %v84 = vld [vmem:[%s3 + $0x8] sm:$0xf]
    %v85 = vld [vmem:[%s3 + $0xc] sm:$0xf]
    %v86 = vld [vmem:[%s3 + $0x10] sm:$0xf]
    %v87 = vld [vmem:[%s3 + $0x14] sm:$0xf]
    %v88 = vld [vmem:[%s3 + $0x18] sm:$0xf]
    %v89 = vld [vmem:[%s3 + $0x1c] sm:$0xf]
    %v90 = vld [vmem:[%s4] sm:$0x1]
    %v92 = vperm.slane %v90, 0
    %v102 = vunpack.c.l.b16 %v82
    %v103 = vunpack.c.l.b16 %v83
    %v104 = vunpack.c.l.b16 %v84
    %v105 = vunpack.c.l.b16 %v85
    %v106 = vunpack.c.l.b16 %v86
    %v107 = vunpack.c.l.b16 %v87
    %v108 = vunpack.c.l.b16 %v88
    %v109 = vunpack.c.l.b16 %v89
    %v110 = vpack.c.b16 %v103, %v102
    %v111 = vpack.c.b16 %v105, %v104
    %v112 = vpack.c.b16 %v107, %v106
    %v113 = vpack.c.b16 %v109, %v108
    %vm118 = vcmask 523264
    %v120 = vsel %vm118, %v81, 0
    %122 = vmatpush.bf16.msra.mxu0 0
    %123 = vmatpush.bf16.msra.mxu0 0
    %124 = vmatpush.bf16.msra.mxu0 0
    %125 = vmatpush.bf16.msra.mxu0 0
    %126 = vmatpush.bf16.msra.mxu0 %v113
    %127 = vmatpush.bf16.msra.mxu0 %v112
    %128 = vmatpush.bf16.msra.mxu0 %v111
    %129 = vmatpush.bf16.msra.mxu0 %v110
    %130 = vmatmul.bf16.gmra.mxu0 %v120
    %v131 = vpop.f32.mrf.mxu0
    %v132 = vadd.f32 %v92, %v131
    %v133 = vpop.f32.mrf.mxu0
    %v134 = vadd.f32 %v92, %v133
    %135 = vdwg.mxu0
    %v136 = vmax.f32 %v132, 0.0
    %v137 = vmax.f32 %v134, 0.0
    %v138 = vpack.c.bf16 %v136, %v136
    %v139 = vld [vmem:[%s5] sm:$0xff]
    %v140 = vld [vmem:[%s5 + $0x8] sm:$0xff]
    %v141 = vld [vmem:[%s5 + $0x10] sm:$0xff]
    %v142 = vld [vmem:[%s5 + $0x18] sm:$0xff]
    %v143 = vld [vmem:[%s5 + $0x20] sm:$0xff]
    %v144 = vld [vmem:[%s5 + $0x28] sm:$0xff]
    %v145 = vld [vmem:[%s5 + $0x30] sm:$0xff]
    %v146 = vld [vmem:[%s5 + $0x38] sm:$0xff]
    %v147 = vld [vmem:[%s5 + $0x40] sm:$0xff]
    %v148 = vld [vmem:[%s5 + $0x48] sm:$0xff]
    %v149 = vld [vmem:[%s5 + $0x50] sm:$0xff]
    %v150 = vld [vmem:[%s5 + $0x58] sm:$0xff]
    %v151 = vld [vmem:[%s5 + $0x60] sm:$0xff]
    %v152 = vld [vmem:[%s5 + $0x68] sm:$0xff]
    %v153 = vld [vmem:[%s5 + $0x70] sm:$0xff]
    %v154 = vld [vmem:[%s5 + $0x78] sm:$0xff]
    %v171 = vunpack.c.l.b16 %v139
    %v172 = vunpack.c.h.b16 %v139
    %v173 = vunpack.c.l.b16 %v140
    %v174 = vunpack.c.h.b16 %v140
    %v175 = vunpack.c.l.b16 %v141
    %v176 = vunpack.c.h.b16 %v141
    %v177 = vunpack.c.l.b16 %v142
    %v178 = vunpack.c.h.b16 %v142
    %v179 = vunpack.c.l.b16 %v143
    %v180 = vunpack.c.h.b16 %v143
    %v181 = vunpack.c.l.b16 %v144
    %v182 = vunpack.c.h.b16 %v144
    %v183 = vunpack.c.l.b16 %v145
    %v184 = vunpack.c.h.b16 %v145
    %v185 = vunpack.c.l.b16 %v146
    %v186 = vunpack.c.h.b16 %v146
    %v187 = vunpack.c.l.b16 %v147
    %v188 = vunpack.c.h.b16 %v147
    %v189 = vunpack.c.l.b16 %v148
    %v190 = vunpack.c.h.b16 %v148
    %v191 = vunpack.c.l.b16 %v149
    %v192 = vunpack.c.h.b16 %v149
    %v193 = vunpack.c.l.b16 %v150
    %v194 = vunpack.c.h.b16 %v150
    %v195 = vunpack.c.l.b16 %v151
    %v196 = vunpack.c.h.b16 %v151
    %v197 = vunpack.c.l.b16 %v152
    %v198 = vunpack.c.h.b16 %v152
    %v199 = vunpack.c.l.b16 %v153
    %v200 = vunpack.c.h.b16 %v153
    %v201 = vunpack.c.l.b16 %v154
    %v202 = vunpack.c.h.b16 %v154
    %v203 = vpack.c.b16 %v179, %v171
    %v204 = vpack.c.b16 %v180, %v172
    %v205 = vpack.c.b16 %v181, %v173
    %v206 = vpack.c.b16 %v182, %v174
    %v207 = vpack.c.b16 %v183, %v175
    %v208 = vpack.c.b16 %v184, %v176
    %v209 = vpack.c.b16 %v185, %v177
    %v210 = vpack.c.b16 %v186, %v178
    %v211 = vpack.c.b16 %v195, %v187
    %v212 = vpack.c.b16 %v196, %v188
    %v213 = vpack.c.b16 %v197, %v189
    %v214 = vpack.c.b16 %v198, %v190
    %v215 = vpack.c.b16 %v199, %v191
    %v216 = vpack.c.b16 %v200, %v192
    %v217 = vpack.c.b16 %v201, %v193
    %v218 = vpack.c.b16 %v202, %v194
    %v236 = vsel %vm61, %v138, 0
    %238 = vmatpush.bf16.msra.mxu0 0
    %239 = vmatpush.bf16.msra.mxu0 0
    %240 = vmatpush.bf16.msra.mxu0 0
    %241 = vmatpush.bf16.msra.mxu0 0
    %242 = vmatpush.bf16.msra.mxu0 0
    %243 = vmatpush.bf16.msra.mxu0 0
    %244 = vmatpush.bf16.msra.mxu0 %v211
    %245 = vmatpush.bf16.msra.mxu0 %v203
    %246 = vmatmul.bf16.gmra.mxu0 %v236
    %v247 = vpop.f32.mrf.mxu0
    %v248 = vadd.f32 0.0, %v247
    %v249 = vpop.f32.mrf.mxu0
    %250 = vdwg.mxu0
    %251 = vmatpush.bf16.msra.mxu0 0
    %252 = vmatpush.bf16.msra.mxu0 0
    %253 = vmatpush.bf16.msra.mxu0 0
    %254 = vmatpush.bf16.msra.mxu0 0
    %255 = vmatpush.bf16.msra.mxu0 0
    %256 = vmatpush.bf16.msra.mxu0 0
    %257 = vmatpush.bf16.msra.mxu0 %v212
    %258 = vmatpush.bf16.msra.mxu0 %v204
    %259 = vmatmul.bf16.gmra.mxu0 %v236
    %v260 = vpop.f32.mrf.mxu0
    %v261 = vadd.f32 0.0, %v260
    %v262 = vpop.f32.mrf.mxu0
    %263 = vdwg.mxu0
    %264 = vmatpush.bf16.msra.mxu0 0
    %265 = vmatpush.bf16.msra.mxu0 0
    %266 = vmatpush.bf16.msra.mxu0 0
    %267 = vmatpush.bf16.msra.mxu0 0
    %268 = vmatpush.bf16.msra.mxu0 0
    %269 = vmatpush.bf16.msra.mxu0 0
    %270 = vmatpush.bf16.msra.mxu0 %v213
    %271 = vmatpush.bf16.msra.mxu0 %v205
    %272 = vmatmul.bf16.gmra.mxu0 %v236
    %v273 = vpop.f32.mrf.mxu0
    %v274 = vadd.f32 0.0, %v273
    %v275 = vpop.f32.mrf.mxu0
    %276 = vdwg.mxu0
    %277 = vmatpush.bf16.msra.mxu0 0
    %278 = vmatpush.bf16.msra.mxu0 0
    %279 = vmatpush.bf16.msra.mxu0 0
    %280 = vmatpush.bf16.msra.mxu0 0
    %281 = vmatpush.bf16.msra.mxu0 0
    %282 = vmatpush.bf16.msra.mxu0 0
    %283 = vmatpush.bf16.msra.mxu0 %v214
    %284 = vmatpush.bf16.msra.mxu0 %v206
    %285 = vmatmul.bf16.gmra.mxu0 %v236
    %v286 = vpop.f32.mrf.mxu0
    %v287 = vadd.f32 0.0, %v286
    %v288 = vpop.f32.mrf.mxu0
    %289 = vdwg.mxu0
    %290 = vmatpush.bf16.msra.mxu0 0
    %291 = vmatpush.bf16.msra.mxu0 0
    %292 = vmatpush.bf16.msra.mxu0 0
    %293 = vmatpush.bf16.msra.mxu0 0
    %294 = vmatpush.bf16.msra.mxu0 0
    %295 = vmatpush.bf16.msra.mxu0 0
    %296 = vmatpush.bf16.msra.mxu0 %v215
    %297 = vmatpush.bf16.msra.mxu0 %v207
    %298 = vmatmul.bf16.gmra.mxu0 %v236
    %v299 = vpop.f32.mrf.mxu0
    %v300 = vadd.f32 0.0, %v299
    %v301 = vpop.f32.mrf.mxu0
    %302 = vdwg.mxu0
    %303 = vmatpush.bf16.msra.mxu0 0
    %304 = vmatpush.bf16.msra.mxu0 0
    %305 = vmatpush.bf16.msra.mxu0 0
    %306 = vmatpush.bf16.msra.mxu0 0
    %307 = vmatpush.bf16.msra.mxu0 0
    %308 = vmatpush.bf16.msra.mxu0 0
    %309 = vmatpush.bf16.msra.mxu0 %v216
    %310 = vmatpush.bf16.msra.mxu0 %v208
    %311 = vmatmul.bf16.gmra.mxu0 %v236
    %v312 = vpop.f32.mrf.mxu0
    %v313 = vadd.f32 0.0, %v312
    %v314 = vpop.f32.mrf.mxu0
    %315 = vdwg.mxu0
    %316 = vmatpush.bf16.msra.mxu0 0
    %317 = vmatpush.bf16.msra.mxu0 0
    %318 = vmatpush.bf16.msra.mxu0 0
    %319 = vmatpush.bf16.msra.mxu0 0
    %320 = vmatpush.bf16.msra.mxu0 0
    %321 = vmatpush.bf16.msra.mxu0 0
    %322 = vmatpush.bf16.msra.mxu0 %v217
    %323 = vmatpush.bf16.msra.mxu0 %v209
    %324 = vmatmul.bf16.gmra.mxu0 %v236
    %v325 = vpop.f32.mrf.mxu0
    %v326 = vadd.f32 0.0, %v325
    %v327 = vpop.f32.mrf.mxu0
    %328 = vdwg.mxu0
    %329 = vmatpush.bf16.msra.mxu0 0
    %330 = vmatpush.bf16.msra.mxu0 0
    %331 = vmatpush.bf16.msra.mxu0 0
    %332 = vmatpush.bf16.msra.mxu0 0
    %333 = vmatpush.bf16.msra.mxu0 0
    %334 = vmatpush.bf16.msra.mxu0 0
    %335 = vmatpush.bf16.msra.mxu0 %v218
    %336 = vmatpush.bf16.msra.mxu0 %v210
    %337 = vmatmul.bf16.gmra.mxu0 %v236
    %v338 = vpop.f32.mrf.mxu0
    %v339 = vadd.f32 0.0, %v338
    %v340 = vpop.f32.mrf.mxu0
    %341 = vdwg.mxu0
    %v342 = vpack.c.bf16 %v137, %v137
    %v343 = vld [vmem:[%s6] sm:$0xff]
    %v344 = vld [vmem:[%s6 + $0x8] sm:$0xff]
    %v345 = vld [vmem:[%s6 + $0x10] sm:$0xff]
    %v346 = vld [vmem:[%s6 + $0x18] sm:$0xff]
    %v347 = vld [vmem:[%s6 + $0x20] sm:$0xff]
    %v348 = vld [vmem:[%s6 + $0x28] sm:$0xff]
    %v349 = vld [vmem:[%s6 + $0x30] sm:$0xff]
    %v350 = vld [vmem:[%s6 + $0x38] sm:$0xff]
    %v351 = vld [vmem:[%s6 + $0x40] sm:$0xff]
    %v352 = vld [vmem:[%s6 + $0x48] sm:$0xff]
    %v353 = vld [vmem:[%s6 + $0x50] sm:$0xff]
    %v354 = vld [vmem:[%s6 + $0x58] sm:$0xff]
    %v355 = vld [vmem:[%s6 + $0x60] sm:$0xff]
    %v356 = vld [vmem:[%s6 + $0x68] sm:$0xff]
    %v357 = vld [vmem:[%s6 + $0x70] sm:$0xff]
    %v358 = vld [vmem:[%s6 + $0x78] sm:$0xff]
    %v375 = vunpack.c.l.b16 %v343
    %v376 = vunpack.c.h.b16 %v343
    %v377 = vunpack.c.l.b16 %v344
    %v378 = vunpack.c.h.b16 %v344
    %v379 = vunpack.c.l.b16 %v345
    %v380 = vunpack.c.h.b16 %v345
    %v381 = vunpack.c.l.b16 %v346
    %v382 = vunpack.c.h.b16 %v346
    %v383 = vunpack.c.l.b16 %v347
    %v384 = vunpack.c.h.b16 %v347
    %v385 = vunpack.c.l.b16 %v348
    %v386 = vunpack.c.h.b16 %v348
    %v387 = vunpack.c.l.b16 %v349
    %v388 = vunpack.c.h.b16 %v349
    %v389 = vunpack.c.l.b16 %v350
    %v390 = vunpack.c.h.b16 %v350
    %v391 = vunpack.c.l.b16 %v351
    %v392 = vunpack.c.h.b16 %v351
    %v393 = vunpack.c.l.b16 %v352
    %v394 = vunpack.c.h.b16 %v352
    %v395 = vunpack.c.l.b16 %v353
    %v396 = vunpack.c.h.b16 %v353
    %v397 = vunpack.c.l.b16 %v354
    %v398 = vunpack.c.h.b16 %v354
    %v399 = vunpack.c.l.b16 %v355
    %v400 = vunpack.c.h.b16 %v355
    %v401 = vunpack.c.l.b16 %v356
    %v402 = vunpack.c.h.b16 %v356
    %v403 = vunpack.c.l.b16 %v357
    %v404 = vunpack.c.h.b16 %v357
    %v405 = vunpack.c.l.b16 %v358
    %v406 = vunpack.c.h.b16 %v358
    %v407 = vpack.c.b16 %v383, %v375
    %v408 = vpack.c.b16 %v384, %v376
    %v409 = vpack.c.b16 %v385, %v377
    %v410 = vpack.c.b16 %v386, %v378
    %v411 = vpack.c.b16 %v387, %v379
    %v412 = vpack.c.b16 %v388, %v380
    %v413 = vpack.c.b16 %v389, %v381
    %v414 = vpack.c.b16 %v390, %v382
    %v415 = vpack.c.b16 %v399, %v391
    %v416 = vpack.c.b16 %v400, %v392
    %v417 = vpack.c.b16 %v401, %v393
    %v418 = vpack.c.b16 %v402, %v394
    %v419 = vpack.c.b16 %v403, %v395
    %v420 = vpack.c.b16 %v404, %v396
    %v421 = vpack.c.b16 %v405, %v397
    %v422 = vpack.c.b16 %v406, %v398
    %v440 = vsel %vm61, %v342, 0
    %442 = vmatpush.bf16.msra.mxu0 0
    %443 = vmatpush.bf16.msra.mxu0 0
    %444 = vmatpush.bf16.msra.mxu0 0
    %445 = vmatpush.bf16.msra.mxu0 0
    %446 = vmatpush.bf16.msra.mxu0 0
    %447 = vmatpush.bf16.msra.mxu0 0
    %448 = vmatpush.bf16.msra.mxu0 %v415
    %449 = vmatpush.bf16.msra.mxu0 %v407
    %450 = vmatmul.bf16.gmra.mxu0 %v440
    %v451 = vpop.f32.mrf.mxu0
    %v452 = vadd.f32 0.0, %v451
    %v453 = vpop.f32.mrf.mxu0
    %454 = vdwg.mxu0
    %455 = vmatpush.bf16.msra.mxu0 0
    %456 = vmatpush.bf16.msra.mxu0 0
    %457 = vmatpush.bf16.msra.mxu0 0
    %458 = vmatpush.bf16.msra.mxu0 0
    %459 = vmatpush.bf16.msra.mxu0 0
    %460 = vmatpush.bf16.msra.mxu0 0
    %461 = vmatpush.bf16.msra.mxu0 %v416
    %462 = vmatpush.bf16.msra.mxu0 %v408
    %463 = vmatmul.bf16.gmra.mxu0 %v440
    %v464 = vpop.f32.mrf.mxu0
    %v465 = vadd.f32 0.0, %v464
    %v466 = vpop.f32.mrf.mxu0
    %467 = vdwg.mxu0
    %468 = vmatpush.bf16.msra.mxu0 0
    %469 = vmatpush.bf16.msra.mxu0 0
    %470 = vmatpush.bf16.msra.mxu0 0
    %471 = vmatpush.bf16.msra.mxu0 0
    %472 = vmatpush.bf16.msra.mxu0 0
    %473 = vmatpush.bf16.msra.mxu0 0
    %474 = vmatpush.bf16.msra.mxu0 %v417
    %475 = vmatpush.bf16.msra.mxu0 %v409
    %476 = vmatmul.bf16.gmra.mxu0 %v440
    %v477 = vpop.f32.mrf.mxu0
    %v478 = vadd.f32 0.0, %v477
    %v479 = vpop.f32.mrf.mxu0
    %480 = vdwg.mxu0
    %481 = vmatpush.bf16.msra.mxu0 0
    %482 = vmatpush.bf16.msra.mxu0 0
    %483 = vmatpush.bf16.msra.mxu0 0
    %484 = vmatpush.bf16.msra.mxu0 0
    %485 = vmatpush.bf16.msra.mxu0 0
    %486 = vmatpush.bf16.msra.mxu0 0
    %487 = vmatpush.bf16.msra.mxu0 %v418
    %488 = vmatpush.bf16.msra.mxu0 %v410
    %489 = vmatmul.bf16.gmra.mxu0 %v440
    %v490 = vpop.f32.mrf.mxu0
    %v491 = vadd.f32 0.0, %v490
    %v492 = vpop.f32.mrf.mxu0
    %493 = vdwg.mxu0
    %494 = vmatpush.bf16.msra.mxu0 0
    %495 = vmatpush.bf16.msra.mxu0 0
    %496 = vmatpush.bf16.msra.mxu0 0
    %497 = vmatpush.bf16.msra.mxu0 0
    %498 = vmatpush.bf16.msra.mxu0 0
    %499 = vmatpush.bf16.msra.mxu0 0
    %500 = vmatpush.bf16.msra.mxu0 %v419
    %501 = vmatpush.bf16.msra.mxu0 %v411
    %502 = vmatmul.bf16.gmra.mxu0 %v440
    %v503 = vpop.f32.mrf.mxu0
    %v504 = vadd.f32 0.0, %v503
    %v505 = vpop.f32.mrf.mxu0
    %506 = vdwg.mxu0
    %507 = vmatpush.bf16.msra.mxu0 0
    %508 = vmatpush.bf16.msra.mxu0 0
    %509 = vmatpush.bf16.msra.mxu0 0
    %510 = vmatpush.bf16.msra.mxu0 0
    %511 = vmatpush.bf16.msra.mxu0 0
    %512 = vmatpush.bf16.msra.mxu0 0
    %513 = vmatpush.bf16.msra.mxu0 %v420
    %514 = vmatpush.bf16.msra.mxu0 %v412
    %515 = vmatmul.bf16.gmra.mxu0 %v440
    %v516 = vpop.f32.mrf.mxu0
    %v517 = vadd.f32 0.0, %v516
    %v518 = vpop.f32.mrf.mxu0
    %519 = vdwg.mxu0
    %520 = vmatpush.bf16.msra.mxu0 0
    %521 = vmatpush.bf16.msra.mxu0 0
    %522 = vmatpush.bf16.msra.mxu0 0
    %523 = vmatpush.bf16.msra.mxu0 0
    %524 = vmatpush.bf16.msra.mxu0 0
    %525 = vmatpush.bf16.msra.mxu0 0
    %526 = vmatpush.bf16.msra.mxu0 %v421
    %527 = vmatpush.bf16.msra.mxu0 %v413
    %528 = vmatmul.bf16.gmra.mxu0 %v440
    %v529 = vpop.f32.mrf.mxu0
    %v530 = vadd.f32 0.0, %v529
    %v531 = vpop.f32.mrf.mxu0
    %532 = vdwg.mxu0
    %533 = vmatpush.bf16.msra.mxu0 0
    %534 = vmatpush.bf16.msra.mxu0 0
    %535 = vmatpush.bf16.msra.mxu0 0
    %536 = vmatpush.bf16.msra.mxu0 0
    %537 = vmatpush.bf16.msra.mxu0 0
    %538 = vmatpush.bf16.msra.mxu0 0
    %539 = vmatpush.bf16.msra.mxu0 %v422
    %540 = vmatpush.bf16.msra.mxu0 %v414
    %541 = vmatmul.bf16.gmra.mxu0 %v440
    %v542 = vpop.f32.mrf.mxu0
    %v543 = vadd.f32 0.0, %v542
    %v544 = vpop.f32.mrf.mxu0
    %545 = vdwg.mxu0
    %v546 = vmul.f32 %v248, %v452
    %v547 = vmul.f32 %v261, %v465
    %v548 = vmul.f32 %v274, %v478
    %v549 = vmul.f32 %v287, %v491
    %v550 = vmul.f32 %v300, %v504
    %v551 = vmul.f32 %v313, %v517
    %v552 = vmul.f32 %v326, %v530
    %v553 = vmul.f32 %v339, %v543
    %v554 = vpack.c.bf16 %v546, %v546
    %v555 = vpack.c.bf16 %v547, %v547
    %v556 = vpack.c.bf16 %v548, %v548
    %v557 = vpack.c.bf16 %v549, %v549
    %v558 = vpack.c.bf16 %v550, %v550
    %v559 = vpack.c.bf16 %v551, %v551
    %v560 = vpack.c.bf16 %v552, %v552
    %v561 = vpack.c.bf16 %v553, %v553
    %v562 = vld [vmem:[%s7] sm:$0xf]
    %v563 = vld [vmem:[%s7 + $0x4] sm:$0xf]
    %v564 = vld [vmem:[%s7 + $0x8] sm:$0xf]
    %v565 = vld [vmem:[%s7 + $0xc] sm:$0xf]
    %v566 = vld [vmem:[%s7 + $0x10] sm:$0xf]
    %v567 = vld [vmem:[%s7 + $0x14] sm:$0xf]
    %v568 = vld [vmem:[%s7 + $0x18] sm:$0xf]
    %v569 = vld [vmem:[%s7 + $0x1c] sm:$0xf]
    %v570 = vld [vmem:[%s7 + $0x20] sm:$0xf]
    %v571 = vld [vmem:[%s7 + $0x24] sm:$0xf]
    %v572 = vld [vmem:[%s7 + $0x28] sm:$0xf]
    %v573 = vld [vmem:[%s7 + $0x2c] sm:$0xf]
    %v574 = vld [vmem:[%s7 + $0x30] sm:$0xf]
    %v575 = vld [vmem:[%s7 + $0x34] sm:$0xf]
    %v576 = vld [vmem:[%s7 + $0x38] sm:$0xf]
    %v577 = vld [vmem:[%s7 + $0x3c] sm:$0xf]
    %v578 = vld [vmem:[%s7 + $0x40] sm:$0xf]
    %v579 = vld [vmem:[%s7 + $0x44] sm:$0xf]
    %v580 = vld [vmem:[%s7 + $0x48] sm:$0xf]
    %v581 = vld [vmem:[%s7 + $0x4c] sm:$0xf]
    %v582 = vld [vmem:[%s7 + $0x50] sm:$0xf]
    %v583 = vld [vmem:[%s7 + $0x54] sm:$0xf]
    %v584 = vld [vmem:[%s7 + $0x58] sm:$0xf]
    %v585 = vld [vmem:[%s7 + $0x5c] sm:$0xf]
    %v586 = vld [vmem:[%s7 + $0x60] sm:$0xf]
    %v587 = vld [vmem:[%s7 + $0x64] sm:$0xf]
    %v588 = vld [vmem:[%s7 + $0x68] sm:$0xf]
    %v589 = vld [vmem:[%s7 + $0x6c] sm:$0xf]
    %v590 = vld [vmem:[%s7 + $0x70] sm:$0xf]
    %v591 = vld [vmem:[%s7 + $0x74] sm:$0xf]
    %v592 = vld [vmem:[%s7 + $0x78] sm:$0xf]
    %v593 = vld [vmem:[%s7 + $0x7c] sm:$0xf]
    %v594 = vld [vmem:[%s7 + $0x80] sm:$0xf]
    %v595 = vld [vmem:[%s7 + $0x84] sm:$0xf]
    %v596 = vld [vmem:[%s7 + $0x88] sm:$0xf]
    %v597 = vld [vmem:[%s7 + $0x8c] sm:$0xf]
    %v598 = vld [vmem:[%s7 + $0x90] sm:$0xf]
    %v599 = vld [vmem:[%s7 + $0x94] sm:$0xf]
    %v600 = vld [vmem:[%s7 + $0x98] sm:$0xf]
    %v601 = vld [vmem:[%s7 + $0x9c] sm:$0xf]
    %v602 = vld [vmem:[%s7 + $0xa0] sm:$0xf]
    %v603 = vld [vmem:[%s7 + $0xa4] sm:$0xf]
    %v604 = vld [vmem:[%s7 + $0xa8] sm:$0xf]
    %v605 = vld [vmem:[%s7 + $0xac] sm:$0xf]
    %v606 = vld [vmem:[%s7 + $0xb0] sm:$0xf]
    %v607 = vld [vmem:[%s7 + $0xb4] sm:$0xf]
    %v608 = vld [vmem:[%s7 + $0xb8] sm:$0xf]
    %v609 = vld [vmem:[%s7 + $0xbc] sm:$0xf]
    %v610 = vld [vmem:[%s7 + $0xc0] sm:$0xf]
    %v611 = vld [vmem:[%s7 + $0xc4] sm:$0xf]
    %v612 = vld [vmem:[%s7 + $0xc8] sm:$0xf]
    %v613 = vld [vmem:[%s7 + $0xcc] sm:$0xf]
    %v614 = vld [vmem:[%s7 + $0xd0] sm:$0xf]
    %v615 = vld [vmem:[%s7 + $0xd4] sm:$0xf]
    %v616 = vld [vmem:[%s7 + $0xd8] sm:$0xf]
    %v617 = vld [vmem:[%s7 + $0xdc] sm:$0xf]
    %v618 = vld [vmem:[%s7 + $0xe0] sm:$0xf]
    %v619 = vld [vmem:[%s7 + $0xe4] sm:$0xf]
    %v620 = vld [vmem:[%s7 + $0xe8] sm:$0xf]
    %v621 = vld [vmem:[%s7 + $0xec] sm:$0xf]
    %v622 = vld [vmem:[%s7 + $0xf0] sm:$0xf]
    %v623 = vld [vmem:[%s7 + $0xf4] sm:$0xf]
    %v624 = vld [vmem:[%s7 + $0xf8] sm:$0xf]
    %v625 = vld [vmem:[%s7 + $0xfc] sm:$0xf]
    %v626 = vld [vmem:[%s7 + $0x100] sm:$0xf]
    %v627 = vld [vmem:[%s7 + $0x104] sm:$0xf]
    %v628 = vld [vmem:[%s7 + $0x108] sm:$0xf]
    %v629 = vld [vmem:[%s7 + $0x10c] sm:$0xf]
    %v630 = vld [vmem:[%s7 + $0x110] sm:$0xf]
    %v631 = vld [vmem:[%s7 + $0x114] sm:$0xf]
    %v632 = vld [vmem:[%s7 + $0x118] sm:$0xf]
    %v633 = vld [vmem:[%s7 + $0x11c] sm:$0xf]
    %v634 = vld [vmem:[%s7 + $0x120] sm:$0xf]
    %v635 = vld [vmem:[%s7 + $0x124] sm:$0xf]
    %v636 = vld [vmem:[%s7 + $0x128] sm:$0xf]
    %v637 = vld [vmem:[%s7 + $0x12c] sm:$0xf]
    %v638 = vld [vmem:[%s7 + $0x130] sm:$0xf]
    %v639 = vld [vmem:[%s7 + $0x134] sm:$0xf]
    %v640 = vld [vmem:[%s7 + $0x138] sm:$0xf]
    %v641 = vld [vmem:[%s7 + $0x13c] sm:$0xf]
    %v642 = vld [vmem:[%s7 + $0x140] sm:$0xf]
    %v643 = vld [vmem:[%s7 + $0x144] sm:$0xf]
    %v644 = vld [vmem:[%s7 + $0x148] sm:$0xf]
    %v645 = vld [vmem:[%s7 + $0x14c] sm:$0xf]
    %v646 = vld [vmem:[%s7 + $0x150] sm:$0xf]
    %v647 = vld [vmem:[%s7 + $0x154] sm:$0xf]
    %v648 = vld [vmem:[%s7 + $0x158] sm:$0xf]
    %v649 = vld [vmem:[%s7 + $0x15c] sm:$0xf]
    %v650 = vld [vmem:[%s7 + $0x160] sm:$0xf]
    %v651 = vld [vmem:[%s7 + $0x164] sm:$0xf]
    %v652 = vld [vmem:[%s7 + $0x168] sm:$0xf]
    %v653 = vld [vmem:[%s7 + $0x16c] sm:$0xf]
    %v654 = vld [vmem:[%s7 + $0x170] sm:$0xf]
    %v655 = vld [vmem:[%s7 + $0x174] sm:$0xf]
    %v656 = vld [vmem:[%s7 + $0x178] sm:$0xf]
    %v657 = vld [vmem:[%s7 + $0x17c] sm:$0xf]
    %v658 = vld [vmem:[%s7 + $0x180] sm:$0xf]
    %v659 = vld [vmem:[%s7 + $0x184] sm:$0xf]
    %v660 = vld [vmem:[%s7 + $0x188] sm:$0xf]
    %v661 = vld [vmem:[%s7 + $0x18c] sm:$0xf]
    %v662 = vld [vmem:[%s7 + $0x190] sm:$0xf]
    %v663 = vld [vmem:[%s7 + $0x194] sm:$0xf]
    %v664 = vld [vmem:[%s7 + $0x198] sm:$0xf]
    %v665 = vld [vmem:[%s7 + $0x19c] sm:$0xf]
    %v666 = vld [vmem:[%s7 + $0x1a0] sm:$0xf]
    %v667 = vld [vmem:[%s7 + $0x1a4] sm:$0xf]
    %v668 = vld [vmem:[%s7 + $0x1a8] sm:$0xf]
    %v669 = vld [vmem:[%s7 + $0x1ac] sm:$0xf]
    %v670 = vld [vmem:[%s7 + $0x1b0] sm:$0xf]
    %v671 = vld [vmem:[%s7 + $0x1b4] sm:$0xf]
    %v672 = vld [vmem:[%s7 + $0x1b8] sm:$0xf]
    %v673 = vld [vmem:[%s7 + $0x1bc] sm:$0xf]
    %v674 = vld [vmem:[%s7 + $0x1c0] sm:$0xf]
    %v675 = vld [vmem:[%s7 + $0x1c4] sm:$0xf]
    %v676 = vld [vmem:[%s7 + $0x1c8] sm:$0xf]
    %v677 = vld [vmem:[%s7 + $0x1cc] sm:$0xf]
    %v678 = vld [vmem:[%s7 + $0x1d0] sm:$0xf]
    %v679 = vld [vmem:[%s7 + $0x1d4] sm:$0xf]
    %v680 = vld [vmem:[%s7 + $0x1d8] sm:$0xf]
    %v681 = vld [vmem:[%s7 + $0x1dc] sm:$0xf]
    %v682 = vld [vmem:[%s7 + $0x1e0] sm:$0xf]
    %v683 = vld [vmem:[%s7 + $0x1e4] sm:$0xf]
    %v684 = vld [vmem:[%s7 + $0x1e8] sm:$0xf]
    %v685 = vld [vmem:[%s7 + $0x1ec] sm:$0xf]
    %v686 = vld [vmem:[%s7 + $0x1f0] sm:$0xf]
    %v687 = vld [vmem:[%s7 + $0x1f4] sm:$0xf]
    %v688 = vld [vmem:[%s7 + $0x1f8] sm:$0xf]
    %v689 = vld [vmem:[%s7 + $0x1fc] sm:$0xf]
    %v690 = vld [vmem:[%s8] sm:$0x1]
    %v692 = vperm.slane %v690, 0
    %v822 = vunpack.c.l.b16 %v562
    %v823 = vunpack.c.l.b16 %v563
    %v824 = vunpack.c.l.b16 %v564
    %v825 = vunpack.c.l.b16 %v565
    %v826 = vunpack.c.l.b16 %v566
    %v827 = vunpack.c.l.b16 %v567
    %v828 = vunpack.c.l.b16 %v568
    %v829 = vunpack.c.l.b16 %v569
    %v830 = vunpack.c.l.b16 %v570
    %v831 = vunpack.c.l.b16 %v571
    %v832 = vunpack.c.l.b16 %v572
    %v833 = vunpack.c.l.b16 %v573
    %v834 = vunpack.c.l.b16 %v574
    %v835 = vunpack.c.l.b16 %v575
    %v836 = vunpack.c.l.b16 %v576
    %v837 = vunpack.c.l.b16 %v577
    %v838 = vunpack.c.l.b16 %v578
    %v839 = vunpack.c.l.b16 %v579
    %v840 = vunpack.c.l.b16 %v580
    %v841 = vunpack.c.l.b16 %v581
    %v842 = vunpack.c.l.b16 %v582
    %v843 = vunpack.c.l.b16 %v583
    %v844 = vunpack.c.l.b16 %v584
    %v845 = vunpack.c.l.b16 %v585
    %v846 = vunpack.c.l.b16 %v586
    %v847 = vunpack.c.l.b16 %v587
    %v848 = vunpack.c.l.b16 %v588
    %v849 = vunpack.c.l.b16 %v589
    %v850 = vunpack.c.l.b16 %v590
    %v851 = vunpack.c.l.b16 %v591
    %v852 = vunpack.c.l.b16 %v592
    %v853 = vunpack.c.l.b16 %v593
    %v854 = vunpack.c.l.b16 %v594
    %v855 = vunpack.c.l.b16 %v595
    %v856 = vunpack.c.l.b16 %v596
    %v857 = vunpack.c.l.b16 %v597
    %v858 = vunpack.c.l.b16 %v598
    %v859 = vunpack.c.l.b16 %v599
    %v860 = vunpack.c.l.b16 %v600
    %v861 = vunpack.c.l.b16 %v601
    %v862 = vunpack.c.l.b16 %v602
    %v863 = vunpack.c.l.b16 %v603
    %v864 = vunpack.c.l.b16 %v604
    %v865 = vunpack.c.l.b16 %v605
    %v866 = vunpack.c.l.b16 %v606
    %v867 = vunpack.c.l.b16 %v607
    %v868 = vunpack.c.l.b16 %v608
    %v869 = vunpack.c.l.b16 %v609
    %v870 = vunpack.c.l.b16 %v610
    %v871 = vunpack.c.l.b16 %v611
    %v872 = vunpack.c.l.b16 %v612
    %v873 = vunpack.c.l.b16 %v613
    %v874 = vunpack.c.l.b16 %v614
    %v875 = vunpack.c.l.b16 %v615
    %v876 = vunpack.c.l.b16 %v616
    %v877 = vunpack.c.l.b16 %v617
    %v878 = vunpack.c.l.b16 %v618
    %v879 = vunpack.c.l.b16 %v619
    %v880 = vunpack.c.l.b16 %v620
    %v881 = vunpack.c.l.b16 %v621
    %v882 = vunpack.c.l.b16 %v622
    %v883 = vunpack.c.l.b16 %v623
    %v884 = vunpack.c.l.b16 %v624
    %v885 = vunpack.c.l.b16 %v625
    %v886 = vunpack.c.l.b16 %v626
    %v887 = vunpack.c.l.b16 %v627
    %v888 = vunpack.c.l.b16 %v628
    %v889 = vunpack.c.l.b16 %v629
    %v890 = vunpack.c.l.b16 %v630
    %v891 = vunpack.c.l.b16 %v631
    %v892 = vunpack.c.l.b16 %v632
    %v893 = vunpack.c.l.b16 %v633
    %v894 = vunpack.c.l.b16 %v634
    %v895 = vunpack.c.l.b16 %v635
    %v896 = vunpack.c.l.b16 %v636
    %v897 = vunpack.c.l.b16 %v637
    %v898 = vunpack.c.l.b16 %v638
    %v899 = vunpack.c.l.b16 %v639
    %v900 = vunpack.c.l.b16 %v640
    %v901 = vunpack.c.l.b16 %v641
    %v902 = vunpack.c.l.b16 %v642
    %v903 = vunpack.c.l.b16 %v643
    %v904 = vunpack.c.l.b16 %v644
    %v905 = vunpack.c.l.b16 %v645
    %v906 = vunpack.c.l.b16 %v646
    %v907 = vunpack.c.l.b16 %v647
    %v908 = vunpack.c.l.b16 %v648
    %v909 = vunpack.c.l.b16 %v649
    %v910 = vunpack.c.l.b16 %v650
    %v911 = vunpack.c.l.b16 %v651
    %v912 = vunpack.c.l.b16 %v652
    %v913 = vunpack.c.l.b16 %v653
    %v914 = vunpack.c.l.b16 %v654
    %v915 = vunpack.c.l.b16 %v655
    %v916 = vunpack.c.l.b16 %v656
    %v917 = vunpack.c.l.b16 %v657
    %v918 = vunpack.c.l.b16 %v658
    %v919 = vunpack.c.l.b16 %v659
    %v920 = vunpack.c.l.b16 %v660
    %v921 = vunpack.c.l.b16 %v661
    %v922 = vunpack.c.l.b16 %v662
    %v923 = vunpack.c.l.b16 %v663
    %v924 = vunpack.c.l.b16 %v664
    %v925 = vunpack.c.l.b16 %v665
    %v926 = vunpack.c.l.b16 %v666
    %v927 = vunpack.c.l.b16 %v667
    %v928 = vunpack.c.l.b16 %v668
    %v929 = vunpack.c.l.b16 %v669
    %v930 = vunpack.c.l.b16 %v670
    %v931 = vunpack.c.l.b16 %v671
    %v932 = vunpack.c.l.b16 %v672
    %v933 = vunpack.c.l.b16 %v673
    %v934 = vunpack.c.l.b16 %v674
    %v935 = vunpack.c.l.b16 %v675
    %v936 = vunpack.c.l.b16 %v676
    %v937 = vunpack.c.l.b16 %v677
    %v938 = vunpack.c.l.b16 %v678
    %v939 = vunpack.c.l.b16 %v679
    %v940 = vunpack.c.l.b16 %v680
    %v941 = vunpack.c.l.b16 %v681
    %v942 = vunpack.c.l.b16 %v682
    %v943 = vunpack.c.l.b16 %v683
    %v944 = vunpack.c.l.b16 %v684
    %v945 = vunpack.c.l.b16 %v685
    %v946 = vunpack.c.l.b16 %v686
    %v947 = vunpack.c.l.b16 %v687
    %v948 = vunpack.c.l.b16 %v688
    %v949 = vunpack.c.l.b16 %v689
    %v950 = vpack.c.b16 %v823, %v822
    %v951 = vpack.c.b16 %v825, %v824
    %v952 = vpack.c.b16 %v827, %v826
    %v953 = vpack.c.b16 %v829, %v828
    %v954 = vpack.c.b16 %v831, %v830
    %v955 = vpack.c.b16 %v833, %v832
    %v956 = vpack.c.b16 %v835, %v834
    %v957 = vpack.c.b16 %v837, %v836
    %v958 = vpack.c.b16 %v839, %v838
    %v959 = vpack.c.b16 %v841, %v840
    %v960 = vpack.c.b16 %v843, %v842
    %v961 = vpack.c.b16 %v845, %v844
    %v962 = vpack.c.b16 %v847, %v846
    %v963 = vpack.c.b16 %v849, %v848
    %v964 = vpack.c.b16 %v851, %v850
    %v965 = vpack.c.b16 %v853, %v852
    %v966 = vpack.c.b16 %v855, %v854
    %v967 = vpack.c.b16 %v857, %v856
    %v968 = vpack.c.b16 %v859, %v858
    %v969 = vpack.c.b16 %v861, %v860
    %v970 = vpack.c.b16 %v863, %v862
    %v971 = vpack.c.b16 %v865, %v864
    %v972 = vpack.c.b16 %v867, %v866
    %v973 = vpack.c.b16 %v869, %v868
    %v974 = vpack.c.b16 %v871, %v870
    %v975 = vpack.c.b16 %v873, %v872
    %v976 = vpack.c.b16 %v875, %v874
    %v977 = vpack.c.b16 %v877, %v876
    %v978 = vpack.c.b16 %v879, %v878
    %v979 = vpack.c.b16 %v881, %v880
    %v980 = vpack.c.b16 %v883, %v882
    %v981 = vpack.c.b16 %v885, %v884
    %v982 = vpack.c.b16 %v887, %v886
    %v983 = vpack.c.b16 %v889, %v888
    %v984 = vpack.c.b16 %v891, %v890
    %v985 = vpack.c.b16 %v893, %v892
    %v986 = vpack.c.b16 %v895, %v894
    %v987 = vpack.c.b16 %v897, %v896
    %v988 = vpack.c.b16 %v899, %v898
    %v989 = vpack.c.b16 %v901, %v900
    %v990 = vpack.c.b16 %v903, %v902
    %v991 = vpack.c.b16 %v905, %v904
    %v992 = vpack.c.b16 %v907, %v906
    %v993 = vpack.c.b16 %v909, %v908
    %v994 = vpack.c.b16 %v911, %v910
    %v995 = vpack.c.b16 %v913, %v912
    %v996 = vpack.c.b16 %v915, %v914
    %v997 = vpack.c.b16 %v917, %v916
    %v998 = vpack.c.b16 %v919, %v918
    %v999 = vpack.c.b16 %v921, %v920
    %v1000 = vpack.c.b16 %v923, %v922
    %v1001 = vpack.c.b16 %v925, %v924
    %v1002 = vpack.c.b16 %v927, %v926
    %v1003 = vpack.c.b16 %v929, %v928
    %v1004 = vpack.c.b16 %v931, %v930
    %v1005 = vpack.c.b16 %v933, %v932
    %v1006 = vpack.c.b16 %v935, %v934
    %v1007 = vpack.c.b16 %v937, %v936
    %v1008 = vpack.c.b16 %v939, %v938
    %v1009 = vpack.c.b16 %v941, %v940
    %v1010 = vpack.c.b16 %v943, %v942
    %v1011 = vpack.c.b16 %v945, %v944
    %v1012 = vpack.c.b16 %v947, %v946
    %v1013 = vpack.c.b16 %v949, %v948
    %1078 = vmatpush.bf16.msra.mxu0 %v957
    %1079 = vmatpush.bf16.msra.mxu0 %v956
    %1080 = vmatpush.bf16.msra.mxu0 %v955
    %1081 = vmatpush.bf16.msra.mxu0 %v954
    %1082 = vmatpush.bf16.msra.mxu0 %v953
    %1083 = vmatpush.bf16.msra.mxu0 %v952
    %1084 = vmatpush.bf16.msra.mxu0 %v951
    %1085 = vmatpush.bf16.msra.mxu0 %v950
    %1086 = vmatmul.bf16.gmra.mxu0 %v554
    %v1087 = vpop.f32.mrf.mxu0
    %v1088 = vadd.f32 %v692, %v1087
    %v1089 = vpop.f32.mrf.mxu0
    %1090 = vdwg.mxu0
    %1091 = vmatpush.bf16.msra.mxu0 %v965
    %1092 = vmatpush.bf16.msra.mxu0 %v964
    %1093 = vmatpush.bf16.msra.mxu0 %v963
    %1094 = vmatpush.bf16.msra.mxu0 %v962
    %1095 = vmatpush.bf16.msra.mxu0 %v961
    %1096 = vmatpush.bf16.msra.mxu0 %v960
    %1097 = vmatpush.bf16.msra.mxu0 %v959
    %1098 = vmatpush.bf16.msra.mxu0 %v958
    %1099 = vmatmul.bf16.gmra.mxu0 %v555
    %v1100 = vpop.f32.mrf.mxu0
    %v1101 = vadd.f32 %v1088, %v1100
    %v1102 = vpop.f32.mrf.mxu0
    %1103 = vdwg.mxu0
    %1104 = vmatpush.bf16.msra.mxu0 %v973
    %1105 = vmatpush.bf16.msra.mxu0 %v972
    %1106 = vmatpush.bf16.msra.mxu0 %v971
    %1107 = vmatpush.bf16.msra.mxu0 %v970
    %1108 = vmatpush.bf16.msra.mxu0 %v969
    %1109 = vmatpush.bf16.msra.mxu0 %v968
    %1110 = vmatpush.bf16.msra.mxu0 %v967
    %1111 = vmatpush.bf16.msra.mxu0 %v966
    %1112 = vmatmul.bf16.gmra.mxu0 %v556
    %v1113 = vpop.f32.mrf.mxu0
    %v1114 = vadd.f32 %v1101, %v1113
    %v1115 = vpop.f32.mrf.mxu0
    %1116 = vdwg.mxu0
    %1117 = vmatpush.bf16.msra.mxu0 %v981
    %1118 = vmatpush.bf16.msra.mxu0 %v980
    %1119 = vmatpush.bf16.msra.mxu0 %v979
    %1120 = vmatpush.bf16.msra.mxu0 %v978
    %1121 = vmatpush.bf16.msra.mxu0 %v977
    %1122 = vmatpush.bf16.msra.mxu0 %v976
    %1123 = vmatpush.bf16.msra.mxu0 %v975
    %1124 = vmatpush.bf16.msra.mxu0 %v974
    %1125 = vmatmul.bf16.gmra.mxu0 %v557
    %v1126 = vpop.f32.mrf.mxu0
    %v1127 = vadd.f32 %v1114, %v1126
    %v1128 = vpop.f32.mrf.mxu0
    %1129 = vdwg.mxu0
    %1130 = vmatpush.bf16.msra.mxu0 %v989
    %1131 = vmatpush.bf16.msra.mxu0 %v988
    %1132 = vmatpush.bf16.msra.mxu0 %v987
    %1133 = vmatpush.bf16.msra.mxu0 %v986
    %1134 = vmatpush.bf16.msra.mxu0 %v985
    %1135 = vmatpush.bf16.msra.mxu0 %v984
    %1136 = vmatpush.bf16.msra.mxu0 %v983
    %1137 = vmatpush.bf16.msra.mxu0 %v982
    %1138 = vmatmul.bf16.gmra.mxu0 %v558
    %v1139 = vpop.f32.mrf.mxu0
    %v1140 = vadd.f32 %v1127, %v1139
    %v1141 = vpop.f32.mrf.mxu0
    %1142 = vdwg.mxu0
    %1143 = vmatpush.bf16.msra.mxu0 %v997
    %1144 = vmatpush.bf16.msra.mxu0 %v996
    %1145 = vmatpush.bf16.msra.mxu0 %v995
    %1146 = vmatpush.bf16.msra.mxu0 %v994
    %1147 = vmatpush.bf16.msra.mxu0 %v993
    %1148 = vmatpush.bf16.msra.mxu0 %v992
    %1149 = vmatpush.bf16.msra.mxu0 %v991
    %1150 = vmatpush.bf16.msra.mxu0 %v990
    %1151 = vmatmul.bf16.gmra.mxu0 %v559
    %v1152 = vpop.f32.mrf.mxu0
    %v1153 = vadd.f32 %v1140, %v1152
    %v1154 = vpop.f32.mrf.mxu0
    %1155 = vdwg.mxu0
    %1156 = vmatpush.bf16.msra.mxu0 %v1005
    %1157 = vmatpush.bf16.msra.mxu0 %v1004
    %1158 = vmatpush.bf16.msra.mxu0 %v1003
    %1159 = vmatpush.bf16.msra.mxu0 %v1002
    %1160 = vmatpush.bf16.msra.mxu0 %v1001
    %1161 = vmatpush.bf16.msra.mxu0 %v1000
    %1162 = vmatpush.bf16.msra.mxu0 %v999
    %1163 = vmatpush.bf16.msra.mxu0 %v998
    %1164 = vmatmul.bf16.gmra.mxu0 %v560
    %v1165 = vpop.f32.mrf.mxu0
    %v1166 = vadd.f32 %v1153, %v1165
    %v1167 = vpop.f32.mrf.mxu0
    %1168 = vdwg.mxu0
    %1169 = vmatpush.bf16.msra.mxu0 %v1013
    %1170 = vmatpush.bf16.msra.mxu0 %v1012
    %1171 = vmatpush.bf16.msra.mxu0 %v1011
    %1172 = vmatpush.bf16.msra.mxu0 %v1010
    %1173 = vmatpush.bf16.msra.mxu0 %v1009
    %1174 = vmatpush.bf16.msra.mxu0 %v1008
    %1175 = vmatpush.bf16.msra.mxu0 %v1007
    %1176 = vmatpush.bf16.msra.mxu0 %v1006
    %1177 = vmatmul.bf16.gmra.mxu0 %v561
    %v1178 = vpop.f32.mrf.mxu0
    %v1179 = vadd.f32 %v1166, %v1178
    %v1180 = vpop.f32.mrf.mxu0
    %1181 = vdwg.mxu0
    %vm1182 = vcmask 130048
    %1183 = vst.msk [vmem:[#allocation2] sm:$0xff] %vm1182, %v1179
    // Predicated region
    $region38: #{tpu_custom_call.1} parent=1 // pred_check
      _
    $region39: #{tpu_custom_call.1} parent=1 // pred_check_branch
      %1185 = sbr.rel (0) target = $region41
    $region40: #{tpu_custom_call.1} parent=1 // pred_region
      %1187 = vsyncadd [#allocation3], 0
      %s1189 = sshll.u32 [#allocation2], 4
      %s1190 = int_to_ptr.vmem [resolvable:$true] %s1189
      %s1191 = sshll.u32 %s9, 4
      %s1192 = int_to_ptr.hbm [resolvable:$true] %s1191
      %1194 = dma.vmem_to_hbm [thread:$0]  %s1190, 128, %s1192, [#allocation3]
    $region41: #{tpu_custom_call.1} parent=1 // pred_fallthru
      _
    // Predicated region
    $region42: #{tpu_custom_call.1} parent=1 // pred_check
      _
    $region43: #{tpu_custom_call.1} parent=1 // pred_check_branch
      %1196 = sbr.rel (0) target = $region45
    $region44: #{tpu_custom_call.1} parent=1 // pred_region
      %1198 = dma.done [#allocation3], 128
    $region45: #{tpu_custom_call.1} parent=1 // pred_fallthru
      _
    %1199 = vsyncpa [#allocation3], 1

</llo_original>
